<compile_context>
chip_gen: v7x
topology: tpu7x:2x2x1
jax: 0.10.0
libtpu: 0.0.40
codegen_flags: <defaults>
</compile_context>

<pallas_src>
from functools import partial

import jax
import jax.numpy as jnp
from jax import lax
from jax.experimental import pallas as pl
from jax.experimental.pallas import tpu as pltpu


def _make_kernel(D, td, nd0, needs_elem_mask, needs_block_skip, binary_labels):
    """Builds the per-tile kernel (shapes / grid layout baked in as constants)."""

    def kernel(pred_ref, l0_ref, l1_ref, out_ref, acc_ref):
        h = pl.program_id(0)
        i = pl.program_id(1)

        @pl.when(i == 0)
        def _init():
            acc_ref[...] = jnp.zeros_like(acc_ref)

        d_start = (h * nd0 + i) * td

        def accumulate():
            # Single pass over VMEM: load each stream once (labels upcast here,
            # never in the wrapper), reuse registers for every reduction below.
            p0 = pred_ref[0].astype(jnp.float32)      # (td, HW)
            p1 = pred_ref[1].astype(jnp.float32)
            l0 = l0_ref[...].astype(jnp.float32)
            l1 = l1_ref[...].astype(jnp.float32)

            if needs_elem_mask:
                # Padded depth rows of the (partially OOB) last block get
                # p = l = 0 so they contribute exactly 0 to every sum (the
                # -100 log clamp keeps 0*log(0) finite on the two-log path,
                # and log(1-0)=0 on the single-log path).
                dd = lax.broadcasted_iota(jnp.int32, p0.shape, 0)
                valid = (d_start + dd) < D
                zero = jnp.float32(0.0)
                p0 = jnp.where(valid, p0, zero)
                p1 = jnp.where(valid, p1, zero)
                l0 = jnp.where(valid, l0, zero)
                l1 = jnp.where(valid, l1, zero)

            if binary_labels:
                # Single-log fast path (labels exactly {0,1}):
                #   y*log(p) + (1-y)*log(1-p) == log(where(y, p, 1-p))
                # with the same per-term -100 clamp as nn.BCELoss.
                bce0 = jnp.maximum(jnp.log(jnp.where(l0 > 0.5, p0, 1.0 - p0)),
                                   -100.0)
                bce1 = jnp.maximum(jnp.log(jnp.where(l1 > 0.5, p1, 1.0 - p1)),
                                   -100.0)
            else:
                # Exact two-log path (soft labels); algebraically simplified,
                # final negation applied in the wrapper.
                lp0 = jnp.maximum(jnp.log(p0), -100.0)
                lq0 = jnp.maximum(jnp.log(1.0 - p0), -100.0)
                bce0 = lq0 + l0 * (lp0 - lq0)
                lp1 = jnp.maximum(jnp.log(p1), -100.0)
                lq1 = jnp.maximum(jnp.log(1.0 - p1), -100.0)
                bce1 = lq1 + l1 * (lp1 - lq1)

            def psum(x):
                # Reduce only over the depth (sublane) axis; keep lanes.
                return jnp.sum(x, axis=0, keepdims=True)      # (1, HW)

            acc_ref[pl.ds(0, 1), :] += psum(bce0)
            acc_ref[pl.ds(1, 1), :] += psum(bce1)
            acc_ref[pl.ds(2, 1), :] += psum(p0 * l0)
            acc_ref[pl.ds(3, 1), :] += psum(p0)
            acc_ref[pl.ds(4, 1), :] += psum(l0)
            acc_ref[pl.ds(5, 1), :] += psum(p1 * l1)
            acc_ref[pl.ds(6, 1), :] += psum(p1)
            acc_ref[pl.ds(7, 1), :] += psum(l1)

        if needs_block_skip:
            # Fully out-of-range duplicated tail block (odd block count on the
            # second half): skip all EUP/VPU/XLU work entirely.  Its (clamped)
            # DMA still happens; removing it too would need per-half trip
            # counts, not worth it for one block.
            @pl.when(d_start < D)
            def _():
                accumulate()
        else:
            accumulate()

        @pl.when(i == pl.num_programs(1) - 1)
        def _fin():
            # The only cross-lane reductions / vector->scalar crossings:
            # once per half, 8 scalars into the SMEM output row.
            for k in range(8):
                out_ref[0, k] = jnp.sum(acc_ref[pl.ds(k, 1), :])

    return kernel


@partial(jax.jit, static_argnames=("binary_labels", "_debug_max_td"))
def dice_ce_loss_multiclass(pred, label, label1, binary_labels=False,
                            _debug_max_td=None):
    """JAX/Pallas port of DiceCeLoss_multiclass.forward.

    pred:   (N, C, D, H, W) with C >= 2, values in (0, 1)
    label:  (N, 1, D, H, W)   (any float/int dtype; upcast in-kernel)
    label1: (N, 1, D, H, W)
    Returns (total_loss, ce_loss, ce_loss1) as f32 scalars.

    Like the PyTorch module, only batch 0 and channels {0,1} are used.
    Set binary_labels=True when labels are exactly {0,1} for the single-log
    fast path (identical result, half the transcendental work).
    """
    assert pred.ndim == 5 and label.ndim == 5 and label1.ndim == 5
    assert pred.shape[1] >= 2, f"need >=2 channels, got {pred.shape}"
    assert pred.shape[2:] == label.shape[2:], (
        f"predict & target shape do not match: {pred.shape} vs {label.shape}")
    assert pred.shape[2:] == label1.shape[2:], (
        f"predict & target1 shape do not match: {pred.shape} vs {label1.shape}")

    N, C, D, H, W = pred.shape
    HW = H * W
    n_elems = float(D * HW)

    # Lane-dense, copy-free (contiguous) reshape: last dim becomes H*W.
    pred4 = pred.reshape(N, C, D, HW)
    lab4 = label.reshape(label.shape[0], label.shape[1], D, HW)
    lab14 = label1.reshape(label1.shape[0], label1.shape[1], D, HW)

    # --- generation-aware per-step stream budget / VMEM limit ---------------
    vmem_cap = 64 * 1024 * 1024
    try:
        info = pltpu.get_tpu_info()
        vmem_cap = int(getattr(info, "vmem_capacity_bytes", vmem_cap))
    except Exception:
        pass
    if vmem_cap >= 100 * 1024 * 1024:        # v5e / v6e: 128 MiB physical VMEM
        stream_budget = 28 * 1024 * 1024
        hard_cap = 64 * 1024 * 1024
    else:                                     # v7x (64 MiB per TC) or unknown
        stream_budget = 12 * 1024 * 1024
        hard_cap = 48 * 1024 * 1024

    # --- pick the D-tile so the double-buffered input streams fit the budget.
    hw_pad = -(-HW // 128) * 128
    row_bytes = hw_pad * (2 * jnp.dtype(pred.dtype).itemsize
                          + jnp.dtype(label.dtype).itemsize
                          + jnp.dtype(label1.dtype).itemsize)
    stream_per_row = 2 * row_bytes            # 4 streams, double-buffered
    raw_td = max(1, stream_budget // max(stream_per_row, 1))
    if _debug_max_td is not None:
        raw_td = min(raw_td, _debug_max_td)
    if raw_td >= D or D <= 8:
        td = D                                # full dim: no (8,128) constraint
    else:
        td = max(8, min(D, (raw_td // 8) * 8))  # multiple of 8

    ndb = -(-D // td)                         # total D blocks
    n_halves = 2 if ndb >= 2 else 1           # 2-way split only if useful
    nd0 = -(-ndb // n_halves)                 # D blocks per half (inner axis)
    needs_block_skip = (n_halves * nd0 != ndb)
    needs_elem_mask = (ndb * td != D)

    td_pad = -(-td // 8) * 8
    vmem_need = td_pad * stream_per_row + 8 * hw_pad * 4 + (2 << 20)
    vmem_limit = int(min(hard_cap, max(32 * 1024 * 1024, vmem_need)))

    def io_idx(h, i):
        # Clamp so the (skipped) duplicated tail block of the second half
        # re-reads the last valid block instead of issuing an OOB DMA.
        return (0, 0, jnp.minimum(h * nd0 + i, ndb - 1), 0)

    kernel = _make_kernel(D, td, nd0, needs_elem_mask, needs_block_skip,
                          binary_labels)

    sums = pl.pallas_call(
        kernel,
        out_shape=jax.ShapeDtypeStruct((n_halves, 8), jnp.float32),
        grid=(n_halves, nd0),
        in_specs=[
            # pred: batch 0, channels [0:2], D-block, full H*W (lane-dense)
            pl.BlockSpec((None, 2, td, HW), io_idx),
            # label / label1: batch 0, channel 0
            pl.BlockSpec((None, None, td, HW), io_idx),
            pl.BlockSpec((None, None, td, HW), io_idx),
        ],
        out_specs=pl.BlockSpec((1, 8), lambda h, i: (h, 0),
                               memory_space=pltpu.SMEM),
        scratch_shapes=[pltpu.VMEM((8, HW), jnp.float32)],
        compiler_params=pltpu.CompilerParams(
            dimension_semantics=("parallel", "arbitrary"),
            vmem_limit_bytes=vmem_limit),
    )(pred4, lab4, lab14)

    s = jnp.sum(sums, axis=0)                 # combine the two halves / cores
    # BCE sums were accumulated un-negated; apply the sign + mean here.
    ce_loss = -s[0] / n_elems
    ce_loss1 = -s[1] / n_elems
    inter0, sum_p0, sum_l0 = s[2], s[3], s[4]
    inter1, sum_p1, sum_l1 = s[5], s[6], s[7]

    eps = 1e-08
    dice0 = (2.0 * inter0 + eps) / (sum_p0 + sum_l0 + eps)
    dice1 = (2.0 * inter1 + eps) / (sum_p1 + sum_l1 + eps)

    ce_loss2 = 0.3 * ce_loss + 0.7 * ce_loss1
    dice2 = jnp.clip(0.3 * dice0 + 0.7 * dice1, 0.0, 1.0)
    dice2 = jnp.where(dice2 < eps, eps, dice2)

    total = ce_loss2 - 0.5 * jnp.log(dice2)
    return total, ce_loss, ce_loss1


if __name__ == "__main__":
    # Small 3D-UNet-like shapes: pred (1, 2, 20, 16, 16), labels (1, 1, 20, 16, 16).
    key = jax.random.PRNGKey(0)
    k_pred, k_lab0, k_lab1 = jax.random.split(key, 3)

    pred_shape = (1, 2, 20, 16, 16)
    lab_shape = (1, 1, 20, 16, 16)

    # pred must lie in (0,1) for BCE; labels are binary {0,1}.
    pred = jax.nn.sigmoid(jax.random.normal(k_pred, pred_shape, dtype=jnp.float32))
    label = (jax.random.uniform(k_lab0, lab_shape) > 0.5).astype(jnp.float32)
    label1 = (jax.random.uniform(k_lab1, lab_shape) > 0.5).astype(jnp.float32)

    # Pure-JAX reference of the same math (no kernel).
    def ref(pred, label, label1):
        p0 = pred[0, 0].reshape(-1)
        p1 = pred[0, 1].reshape(-1)
        l0 = label[0, 0].reshape(-1)
        l1 = label1[0, 0].reshape(-1)

        def bce(p, y):
            lp = jnp.maximum(jnp.log(p), -100.0)
            l1p = jnp.maximum(jnp.log(1.0 - p), -100.0)
            return -jnp.mean(y * lp + (1.0 - y) * l1p)

        ce = bce(p0, l0)
        ce_1 = bce(p1, l1)
        eps = 1e-08
        d0 = (2.0 * jnp.sum(p0 * l0) + eps) / (jnp.sum(p0) + jnp.sum(l0) + eps)
        d1 = (2.0 * jnp.sum(p1 * l1) + eps) / (jnp.sum(p1) + jnp.sum(l1) + eps)
        ce2 = 0.3 * ce + 0.7 * ce_1
        d2 = jnp.clip(0.3 * d0 + 0.7 * d1, 0.0, 1.0)
        d2 = jnp.where(d2 < eps, eps, d2)
        return ce2 - 0.5 * jnp.log(d2), ce, ce_1

    rt, rc0, rc1 = ref(pred, label, label1)

    # (a) default exact two-log path, single D block (td == D).
    out_a = dice_ce_loss_multiclass(pred, label, label1)
    # (b) binary-label single-log fast path with forced small D tiles: exercises
    #     the 2-way half split, duplicated-tail block skip and partial-tail mask.
    out_b = dice_ce_loss_multiclass(pred, label, label1,
                                    binary_labels=True, _debug_max_td=8)
    jax.block_until_ready((out_a, out_b))

    for (t, c0, c1) in (out_a, out_b):
        assert jnp.allclose(t, rt, rtol=1e-5, atol=1e-5), (t, rt)
        assert jnp.allclose(c0, rc0, rtol=1e-5, atol=1e-5), (c0, rc0)
        assert jnp.allclose(c1, rc1, rtol=1e-5, atol=1e-5), (c1, rc1)

    print("KERNEL_OK")
</pallas_src>

<mosaic_0001>
module attributes {stable_mosaic.version = 11 : i64} {
  func.func @kernel(%arg0: i32, %arg1: i32, %arg2: memref<1x2x20x256xf32, #tpu.memory_space<vmem>>, %arg3: memref<1x1x20x256xf32, #tpu.memory_space<vmem>>, %arg4: memref<1x1x20x256xf32, #tpu.memory_space<vmem>>, %arg5: memref<1x8xf32, #tpu.memory_space<smem>>, %arg6: memref<8x256xf32, #tpu.memory_space<vmem>>) attributes {dimension_semantics = [#tpu.dimension_semantics<parallel>, #tpu.dimension_semantics<arbitrary>], iteration_bounds = array<i64: 1, 1>, scalar_prefetch = 0 : i64, scratch_operands = 1 : i64, tpu.core_type = #tpu.core_type<tc>, window_params = [{transform_indices = @transform_0, window_bounds = array<i64: 1, 2, 20, 256>}, {transform_indices = @transform_1, window_bounds = array<i64: 1, 1, 20, 256>}, {transform_indices = @transform_2, window_bounds = array<i64: 1, 1, 20, 256>}, {transform_indices = @transform_3, window_bounds = array<i64: 1, 8>}]} {
    %c0_i32 = arith.constant 0 : i32
    %0 = arith.cmpi eq, %arg1, %c0_i32 : i32
    %1 = arith.extui %0 : i1 to i32
    %c0_i32_0 = arith.constant 0 : i32
    %2 = arith.cmpi ne, %1, %c0_i32_0 : i32
    scf.if %2 {
      %cst_56 = arith.constant 0.000000e+00 : f32
      %78 = vector.broadcast %cst_56 : f32 to vector<8x256xf32>
      %c0_57 = arith.constant 0 : index
      %c0_58 = arith.constant 0 : index
      %79 = vector.load %arg6[%c0_57, %c0_58] : memref<8x256xf32, #tpu.memory_space<vmem>>, vector<8x256xf32>
      tpu.vector_store %arg6[%c0_57, %c0_58], %78 {strides = array<i32>} : memref<8x256xf32, #tpu.memory_space<vmem>>, vector<8x256xf32>,
    } else {
    }
    %c0 = arith.constant 0 : index
    %c0_1 = arith.constant 0 : index
    %c0_2 = arith.constant 0 : index
    %c0_3 = arith.constant 0 : index
    %3 = vector.load %arg2[%c0, %c0_1, %c0_2, %c0_3] : memref<1x2x20x256xf32, #tpu.memory_space<vmem>>, vector<1x1x20x256xf32>
    %4 = vector.shape_cast %3 : vector<1x1x20x256xf32> to vector<20x256xf32>
    %c0_4 = arith.constant 0 : index
    %c1 = arith.constant 1 : index
    %c0_5 = arith.constant 0 : index
    %c0_6 = arith.constant 0 : index
    %5 = vector.load %arg2[%c0_4, %c1, %c0_5, %c0_6] : memref<1x2x20x256xf32, #tpu.memory_space<vmem>>, vector<1x1x20x256xf32>
    %6 = vector.shape_cast %5 : vector<1x1x20x256xf32> to vector<20x256xf32>
    %c0_7 = arith.constant 0 : index
    %c0_8 = arith.constant 0 : index
    %c0_9 = arith.constant 0 : index
    %c0_10 = arith.constant 0 : index
    %7 = vector.load %arg3[%c0_7, %c0_8, %c0_9, %c0_10] : memref<1x1x20x256xf32, #tpu.memory_space<vmem>>, vector<1x1x20x256xf32>
    %8 = vector.shape_cast %7 : vector<1x1x20x256xf32> to vector<20x256xf32>
    %c0_11 = arith.constant 0 : index
    %c0_12 = arith.constant 0 : index
    %c0_13 = arith.constant 0 : index
    %c0_14 = arith.constant 0 : index
    %9 = vector.load %arg4[%c0_11, %c0_12, %c0_13, %c0_14] : memref<1x1x20x256xf32, #tpu.memory_space<vmem>>, vector<1x1x20x256xf32>
    %10 = vector.shape_cast %9 : vector<1x1x20x256xf32> to vector<20x256xf32>
    %11 = math.log %4 : vector<20x256xf32>
    %cst = arith.constant -1.000000e+02 : f32
    %12 = vector.broadcast %cst : f32 to vector<20x256xf32>
    %13 = arith.maximumf %11, %12 : vector<20x256xf32>
    %cst_15 = arith.constant 1.000000e+00 : f32
    %14 = vector.broadcast %cst_15 : f32 to vector<20x256xf32>
    %15 = arith.subf %14, %4 : vector<20x256xf32>
    %16 = math.log %15 : vector<20x256xf32>
    %cst_16 = arith.constant -1.000000e+02 : f32
    %17 = vector.broadcast %cst_16 : f32 to vector<20x256xf32>
    %18 = arith.maximumf %16, %17 : vector<20x256xf32>
    %19 = arith.subf %13, %18 : vector<20x256xf32>
    %20 = arith.mulf %8, %19 : vector<20x256xf32>
    %21 = arith.addf %18, %20 : vector<20x256xf32>
    %22 = math.log %6 : vector<20x256xf32>
    %cst_17 = arith.constant -1.000000e+02 : f32
    %23 = vector.broadcast %cst_17 : f32 to vector<20x256xf32>
    %24 = arith.maximumf %22, %23 : vector<20x256xf32>
    %cst_18 = arith.constant 1.000000e+00 : f32
    %25 = vector.broadcast %cst_18 : f32 to vector<20x256xf32>
    %26 = arith.subf %25, %6 : vector<20x256xf32>
    %27 = math.log %26 : vector<20x256xf32>
    %cst_19 = arith.constant -1.000000e+02 : f32
    %28 = vector.broadcast %cst_19 : f32 to vector<20x256xf32>
    %29 = arith.maximumf %27, %28 : vector<20x256xf32>
    %30 = arith.subf %24, %29 : vector<20x256xf32>
    %31 = arith.mulf %10, %30 : vector<20x256xf32>
    %32 = arith.addf %29, %31 : vector<20x256xf32>
    %c0_20 = arith.constant 0 : index
    %c0_21 = arith.constant 0 : index
    %33 = vector.load %arg6[%c0_20, %c0_21] : memref<8x256xf32, #tpu.memory_space<vmem>>, vector<1x256xf32>
    %cst_22 = arith.constant dense<0.000000e+00> : vector<256xf32>
    %34 = vector.multi_reduction <add>, %21, %cst_22 [0] : vector<20x256xf32> to vector<256xf32>
    %35 = vector.shape_cast %34 : vector<256xf32> to vector<1x256xf32>
    %36 = arith.addf %33, %35 : vector<1x256xf32>
    %c0_23 = arith.constant 0 : index
    %c0_24 = arith.constant 0 : index
    %37 = vector.load %arg6[%c0_23, %c0_24] : memref<8x256xf32, #tpu.memory_space<vmem>>, vector<1x256xf32>
    tpu.vector_store %arg6[%c0_23, %c0_24], %36 {strides = array<i32>} : memref<8x256xf32, #tpu.memory_space<vmem>>, vector<1x256xf32>,
    %c1_25 = arith.constant 1 : index
    %c0_26 = arith.constant 0 : index
    %38 = vector.load %arg6[%c1_25, %c0_26] : memref<8x256xf32, #tpu.memory_space<vmem>>, vector<1x256xf32>
    %cst_27 = arith.constant dense<0.000000e+00> : vector<256xf32>
    %39 = vector.multi_reduction <add>, %32, %cst_27 [0] : vector<20x256xf32> to vector<256xf32>
    %40 = vector.shape_cast %39 : vector<256xf32> to vector<1x256xf32>
    %41 = arith.addf %38, %40 : vector<1x256xf32>
    %c1_28 = arith.constant 1 : index
    %c0_29 = arith.constant 0 : index
    %42 = vector.load %arg6[%c1_28, %c0_29] : memref<8x256xf32, #tpu.memory_space<vmem>>, vector<1x256xf32>
    tpu.vector_store %arg6[%c1_28, %c0_29], %41 {strides = array<i32>} : memref<8x256xf32, #tpu.memory_space<vmem>>, vector<1x256xf32>,
    %c2 = arith.constant 2 : index
    %c0_30 = arith.constant 0 : index
    %43 = vector.load %arg6[%c2, %c0_30] : memref<8x256xf32, #tpu.memory_space<vmem>>, vector<1x256xf32>
    %44 = arith.mulf %4, %8 : vector<20x256xf32>
    %cst_31 = arith.constant dense<0.000000e+00> : vector<256xf32>
    %45 = vector.multi_reduction <add>, %44, %cst_31 [0] : vector<20x256xf32> to vector<256xf32>
    %46 = vector.shape_cast %45 : vector<256xf32> to vector<1x256xf32>
    %47 = arith.addf %43, %46 : vector<1x256xf32>
    %c2_32 = arith.constant 2 : index
    %c0_33 = arith.constant 0 : index
    %48 = vector.load %arg6[%c2_32, %c0_33] : memref<8x256xf32, #tpu.memory_space<vmem>>, vector<1x256xf32>
    tpu.vector_store %arg6[%c2_32, %c0_33], %47 {strides = array<i32>} : memref<8x256xf32, #tpu.memory_space<vmem>>, vector<1x256xf32>,
    %c3 = arith.constant 3 : index
    %c0_34 = arith.constant 0 : index
    %49 = vector.load %arg6[%c3, %c0_34] : memref<8x256xf32, #tpu.memory_space<vmem>>, vector<1x256xf32>
    %cst_35 = arith.constant dense<0.000000e+00> : vector<256xf32>
    %50 = vector.multi_reduction <add>, %4, %cst_35 [0] : vector<20x256xf32> to vector<256xf32>
    %51 = vector.shape_cast %50 : vector<256xf32> to vector<1x256xf32>
    %52 = arith.addf %49, %51 : vector<1x256xf32>
    %c3_36 = arith.constant 3 : index
    %c0_37 = arith.constant 0 : index
    %53 = vector.load %arg6[%c3_36, %c0_37] : memref<8x256xf32, #tpu.memory_space<vmem>>, vector<1x256xf32>
    tpu.vector_store %arg6[%c3_36, %c0_37], %52 {strides = array<i32>} : memref<8x256xf32, #tpu.memory_space<vmem>>, vector<1x256xf32>,
    %c4 = arith.constant 4 : index
    %c0_38 = arith.constant 0 : index
    %54 = vector.load %arg6[%c4, %c0_38] : memref<8x256xf32, #tpu.memory_space<vmem>>, vector<1x256xf32>
    %cst_39 = arith.constant dense<0.000000e+00> : vector<256xf32>
    %55 = vector.multi_reduction <add>, %8, %cst_39 [0] : vector<20x256xf32> to vector<256xf32>
    %56 = vector.shape_cast %55 : vector<256xf32> to vector<1x256xf32>
    %57 = arith.addf %54, %56 : vector<1x256xf32>
    %c4_40 = arith.constant 4 : index
    %c0_41 = arith.constant 0 : index
    %58 = vector.load %arg6[%c4_40, %c0_41] : memref<8x256xf32, #tpu.memory_space<vmem>>, vector<1x256xf32>
    tpu.vector_store %arg6[%c4_40, %c0_41], %57 {strides = array<i32>} : memref<8x256xf32, #tpu.memory_space<vmem>>, vector<1x256xf32>,
    %c5 = arith.constant 5 : index
    %c0_42 = arith.constant 0 : index
    %59 = vector.load %arg6[%c5, %c0_42] : memref<8x256xf32, #tpu.memory_space<vmem>>, vector<1x256xf32>
    %60 = arith.mulf %6, %10 : vector<20x256xf32>
    %cst_43 = arith.constant dense<0.000000e+00> : vector<256xf32>
    %61 = vector.multi_reduction <add>, %60, %cst_43 [0] : vector<20x256xf32> to vector<256xf32>
    %62 = vector.shape_cast %61 : vector<256xf32> to vector<1x256xf32>
    %63 = arith.addf %59, %62 : vector<1x256xf32>
    %c5_44 = arith.constant 5 : index
    %c0_45 = arith.constant 0 : index
    %64 = vector.load %arg6[%c5_44, %c0_45] : memref<8x256xf32, #tpu.memory_space<vmem>>, vector<1x256xf32>
    tpu.vector_store %arg6[%c5_44, %c0_45], %63 {strides = array<i32>} : memref<8x256xf32, #tpu.memory_space<vmem>>, vector<1x256xf32>,
    %c6 = arith.constant 6 : index
    %c0_46 = arith.constant 0 : index
    %65 = vector.load %arg6[%c6, %c0_46] : memref<8x256xf32, #tpu.memory_space<vmem>>, vector<1x256xf32>
    %cst_47 = arith.constant dense<0.000000e+00> : vector<256xf32>
    %66 = vector.multi_reduction <add>, %6, %cst_47 [0] : vector<20x256xf32> to vector<256xf32>
    %67 = vector.shape_cast %66 : vector<256xf32> to vector<1x256xf32>
    %68 = arith.addf %65, %67 : vector<1x256xf32>
    %c6_48 = arith.constant 6 : index
    %c0_49 = arith.constant 0 : index
    %69 = vector.load %arg6[%c6_48, %c0_49] : memref<8x256xf32, #tpu.memory_space<vmem>>, vector<1x256xf32>
    tpu.vector_store %arg6[%c6_48, %c0_49], %68 {strides = array<i32>} : memref<8x256xf32, #tpu.memory_space<vmem>>, vector<1x256xf32>,
    %c7 = arith.constant 7 : index
    %c0_50 = arith.constant 0 : index
    %70 = vector.load %arg6[%c7, %c0_50] : memref<8x256xf32, #tpu.memory_space<vmem>>, vector<1x256xf32>
    %cst_51 = arith.constant dense<0.000000e+00> : vector<256xf32>
    %71 = vector.multi_reduction <add>, %10, %cst_51 [0] : vector<20x256xf32> to vector<256xf32>
    %72 = vector.shape_cast %71 : vector<256xf32> to vector<1x256xf32>
    %73 = arith.addf %70, %72 : vector<1x256xf32>
    %c7_52 = arith.constant 7 : index
    %c0_53 = arith.constant 0 : index
    %74 = vector.load %arg6[%c7_52, %c0_53] : memref<8x256xf32, #tpu.memory_space<vmem>>, vector<1x256xf32>
    tpu.vector_store %arg6[%c7_52, %c0_53], %73 {strides = array<i32>} : memref<8x256xf32, #tpu.memory_space<vmem>>, vector<1x256xf32>,
    %c0_i32_54 = arith.constant 0 : i32
    %75 = arith.cmpi eq, %arg1, %c0_i32_54 : i32
    %76 = arith.extui %75 : i1 to i32
    %c0_i32_55 = arith.constant 0 : i32
    %77 = arith.cmpi ne, %76, %c0_i32_55 : i32
    scf.if %77 {
      %c0_56 = arith.constant 0 : index
      %c0_57 = arith.constant 0 : index
      %78 = vector.load %arg6[%c0_56, %c0_57] : memref<8x256xf32, #tpu.memory_space<vmem>>, vector<1x256xf32>
      %79 = vector.shape_cast %78 : vector<1x256xf32> to vector<1x1x256xf32>
      %cst_58 = arith.constant dense<0.000000e+00> : vector<1xf32>
      %80 = vector.multi_reduction <add>, %79, %cst_58 [1, 2] : vector<1x1x256xf32> to vector<1xf32>
      %81 = vector.shape_cast %80 : vector<1xf32> to vector<1x1x1xf32>
      %82 = vector.extract %81[0, 0, 0] : f32 from vector<1x1x1xf32>
      %c0_59 = arith.constant 0 : index
      %c0_60 = arith.constant 0 : index
      %83 = memref.load %arg5[%c0_59, %c0_60] : memref<1x8xf32, #tpu.memory_space<smem>>
      memref.store %82, %arg5[%c0_59, %c0_60] : memref<1x8xf32, #tpu.memory_space<smem>>
      %c1_61 = arith.constant 1 : index
      %c0_62 = arith.constant 0 : index
      %84 = vector.load %arg6[%c1_61, %c0_62] : memref<8x256xf32, #tpu.memory_space<vmem>>, vector<1x256xf32>
      %85 = vector.shape_cast %84 : vector<1x256xf32> to vector<1x1x256xf32>
      %cst_63 = arith.constant dense<0.000000e+00> : vector<1xf32>
      %86 = vector.multi_reduction <add>, %85, %cst_63 [1, 2] : vector<1x1x256xf32> to vector<1xf32>
      %87 = vector.shape_cast %86 : vector<1xf32> to vector<1x1x1xf32>
      %88 = vector.extract %87[0, 0, 0] : f32 from vector<1x1x1xf32>
      %c0_64 = arith.constant 0 : index
      %c1_65 = arith.constant 1 : index
      %89 = memref.load %arg5[%c0_64, %c1_65] : memref<1x8xf32, #tpu.memory_space<smem>>
      memref.store %88, %arg5[%c0_64, %c1_65] : memref<1x8xf32, #tpu.memory_space<smem>>
      %c2_66 = arith.constant 2 : index
      %c0_67 = arith.constant 0 : index
      %90 = vector.load %arg6[%c2_66, %c0_67] : memref<8x256xf32, #tpu.memory_space<vmem>>, vector<1x256xf32>
      %91 = vector.shape_cast %90 : vector<1x256xf32> to vector<1x1x256xf32>
      %cst_68 = arith.constant dense<0.000000e+00> : vector<1xf32>
      %92 = vector.multi_reduction <add>, %91, %cst_68 [1, 2] : vector<1x1x256xf32> to vector<1xf32>
      %93 = vector.shape_cast %92 : vector<1xf32> to vector<1x1x1xf32>
      %94 = vector.extract %93[0, 0, 0] : f32 from vector<1x1x1xf32>
      %c0_69 = arith.constant 0 : index
      %c2_70 = arith.constant 2 : index
      %95 = memref.load %arg5[%c0_69, %c2_70] : memref<1x8xf32, #tpu.memory_space<smem>>
      memref.store %94, %arg5[%c0_69, %c2_70] : memref<1x8xf32, #tpu.memory_space<smem>>
      %c3_71 = arith.constant 3 : index
      %c0_72 = arith.constant 0 : index
      %96 = vector.load %arg6[%c3_71, %c0_72] : memref<8x256xf32, #tpu.memory_space<vmem>>, vector<1x256xf32>
      %97 = vector.shape_cast %96 : vector<1x256xf32> to vector<1x1x256xf32>
      %cst_73 = arith.constant dense<0.000000e+00> : vector<1xf32>
      %98 = vector.multi_reduction <add>, %97, %cst_73 [1, 2] : vector<1x1x256xf32> to vector<1xf32>
      %99 = vector.shape_cast %98 : vector<1xf32> to vector<1x1x1xf32>
      %100 = vector.extract %99[0, 0, 0] : f32 from vector<1x1x1xf32>
      %c0_74 = arith.constant 0 : index
      %c3_75 = arith.constant 3 : index
      %101 = memref.load %arg5[%c0_74, %c3_75] : memref<1x8xf32, #tpu.memory_space<smem>>
      memref.store %100, %arg5[%c0_74, %c3_75] : memref<1x8xf32, #tpu.memory_space<smem>>
      %c4_76 = arith.constant 4 : index
      %c0_77 = arith.constant 0 : index
      %102 = vector.load %arg6[%c4_76, %c0_77] : memref<8x256xf32, #tpu.memory_space<vmem>>, vector<1x256xf32>
      %103 = vector.shape_cast %102 : vector<1x256xf32> to vector<1x1x256xf32>
      %cst_78 = arith.constant dense<0.000000e+00> : vector<1xf32>
      %104 = vector.multi_reduction <add>, %103, %cst_78 [1, 2] : vector<1x1x256xf32> to vector<1xf32>
      %105 = vector.shape_cast %104 : vector<1xf32> to vector<1x1x1xf32>
      %106 = vector.extract %105[0, 0, 0] : f32 from vector<1x1x1xf32>
      %c0_79 = arith.constant 0 : index
      %c4_80 = arith.constant 4 : index
      %107 = memref.load %arg5[%c0_79, %c4_80] : memref<1x8xf32, #tpu.memory_space<smem>>
      memref.store %106, %arg5[%c0_79, %c4_80] : memref<1x8xf32, #tpu.memory_space<smem>>
      %c5_81 = arith.constant 5 : index
      %c0_82 = arith.constant 0 : index
      %108 = vector.load %arg6[%c5_81, %c0_82] : memref<8x256xf32, #tpu.memory_space<vmem>>, vector<1x256xf32>
      %109 = vector.shape_cast %108 : vector<1x256xf32> to vector<1x1x256xf32>
      %cst_83 = arith.constant dense<0.000000e+00> : vector<1xf32>
      %110 = vector.multi_reduction <add>, %109, %cst_83 [1, 2] : vector<1x1x256xf32> to vector<1xf32>
      %111 = vector.shape_cast %110 : vector<1xf32> to vector<1x1x1xf32>
      %112 = vector.extract %111[0, 0, 0] : f32 from vector<1x1x1xf32>
      %c0_84 = arith.constant 0 : index
      %c5_85 = arith.constant 5 : index
      %113 = memref.load %arg5[%c0_84, %c5_85] : memref<1x8xf32, #tpu.memory_space<smem>>
      memref.store %112, %arg5[%c0_84, %c5_85] : memref<1x8xf32, #tpu.memory_space<smem>>
      %c6_86 = arith.constant 6 : index
      %c0_87 = arith.constant 0 : index
      %114 = vector.load %arg6[%c6_86, %c0_87] : memref<8x256xf32, #tpu.memory_space<vmem>>, vector<1x256xf32>
      %115 = vector.shape_cast %114 : vector<1x256xf32> to vector<1x1x256xf32>
      %cst_88 = arith.constant dense<0.000000e+00> : vector<1xf32>
      %116 = vector.multi_reduction <add>, %115, %cst_88 [1, 2] : vector<1x1x256xf32> to vector<1xf32>
      %117 = vector.shape_cast %116 : vector<1xf32> to vector<1x1x1xf32>
      %118 = vector.extract %117[0, 0, 0] : f32 from vector<1x1x1xf32>
      %c0_89 = arith.constant 0 : index
      %c6_90 = arith.constant 6 : index
      %119 = memref.load %arg5[%c0_89, %c6_90] : memref<1x8xf32, #tpu.memory_space<smem>>
      memref.store %118, %arg5[%c0_89, %c6_90] : memref<1x8xf32, #tpu.memory_space<smem>>
      %c7_91 = arith.constant 7 : index
      %c0_92 = arith.constant 0 : index
      %120 = vector.load %arg6[%c7_91, %c0_92] : memref<8x256xf32, #tpu.memory_space<vmem>>, vector<1x256xf32>
      %121 = vector.shape_cast %120 : vector<1x256xf32> to vector<1x1x256xf32>
      %cst_93 = arith.constant dense<0.000000e+00> : vector<1xf32>
      %122 = vector.multi_reduction <add>, %121, %cst_93 [1, 2] : vector<1x1x256xf32> to vector<1xf32>
      %123 = vector.shape_cast %122 : vector<1xf32> to vector<1x1x1xf32>
      %124 = vector.extract %123[0, 0, 0] : f32 from vector<1x1x1xf32>
      %c0_94 = arith.constant 0 : index
      %c7_95 = arith.constant 7 : index
      %125 = memref.load %arg5[%c0_94, %c7_95] : memref<1x8xf32, #tpu.memory_space<smem>>
      memref.store %124, %arg5[%c0_94, %c7_95] : memref<1x8xf32, #tpu.memory_space<smem>>
    } else {
    }
    return
  }
  func.func @transform_0(%arg0: i32, %arg1: i32) -> (i32, i32, i32, i32) {
    %c1_i32 = arith.constant 1 : i32
    %0 = arith.muli %arg0, %c1_i32 : i32
    %1 = arith.addi %0, %arg1 : i32
    %c0_i32 = arith.constant 0 : i32
    %2 = arith.minsi %1, %c0_i32 : i32
    %c0_i32_0 = arith.constant 0 : i32
    %c0_i32_1 = arith.constant 0 : i32
    %c0_i32_2 = arith.constant 0 : i32
    %c0_i32_3 = arith.constant 0 : i32
    return %c0_i32_0, %c0_i32_1, %2, %c0_i32_2 : i32, i32, i32, i32
  }
  func.func @transform_1(%arg0: i32, %arg1: i32) -> (i32, i32, i32, i32) {
    %c1_i32 = arith.constant 1 : i32
    %0 = arith.muli %arg0, %c1_i32 : i32
    %1 = arith.addi %0, %arg1 : i32
    %c0_i32 = arith.constant 0 : i32
    %2 = arith.minsi %1, %c0_i32 : i32
    %c0_i32_0 = arith.constant 0 : i32
    %c0_i32_1 = arith.constant 0 : i32
    %c0_i32_2 = arith.constant 0 : i32
    %c0_i32_3 = arith.constant 0 : i32
    return %c0_i32_0, %c0_i32_1, %2, %c0_i32_2 : i32, i32, i32, i32
  }
  func.func @transform_2(%arg0: i32, %arg1: i32) -> (i32, i32, i32, i32) {
    %c1_i32 = arith.constant 1 : i32
    %0 = arith.muli %arg0, %c1_i32 : i32
    %1 = arith.addi %0, %arg1 : i32
    %c0_i32 = arith.constant 0 : i32
    %2 = arith.minsi %1, %c0_i32 : i32
    %c0_i32_0 = arith.constant 0 : i32
    %c0_i32_1 = arith.constant 0 : i32
    %c0_i32_2 = arith.constant 0 : i32
    %c0_i32_3 = arith.constant 0 : i32
    return %c0_i32_0, %c0_i32_1, %2, %c0_i32_2 : i32, i32, i32, i32
  }
  func.func @transform_3(%arg0: i32, %arg1: i32) -> (i32, i32) {
    %c0_i32 = arith.constant 0 : i32
    %c0_i32_0 = arith.constant 0 : i32
    return %arg0, %c0_i32 : i32, i32
  }
}

</mosaic_0001>

<llo_original>
// kernel: dice_ce_loss_multiclass.1
$region0: #{dice_ce_loss_multiclass.1}
  #allocation0 [shape = 'u32[]', space=smem, size = 0x4, offset = 0x4, fixed_abs, tag = 'smem constant byte address 0x4 - core index']
  #allocation1 [shape = 'u32[144,128]{1,0:T(1,128)}', space=vmem, size = 0x12000, scoped, tag = 'internal scratch']
  #allocation2 [shape = 'f32[8,256]{1,0:T(8,128)}', space=vmem, size = 0x2000, scoped, tag = 'scratch operand']
  %s0 = inlined_call_operand.vmem [shape: f32[1,2,20,256], index: 0, kind: input, shape index: {}]
  %s1 = inlined_call_operand.vmem [shape: f32[1,1,20,256], index: 1, kind: input, shape index: {}]
  %s2 = inlined_call_operand.vmem [shape: f32[1,1,20,256], index: 2, kind: input, shape index: {}]
  %s3 = inlined_call_operand.vmem [shape: f32[1,8], index: 3, kind: output, shape index: {}]
  %s4 = sld [smem:[#allocation0]]
  $region30: #{dice_ce_loss_multiclass.1} parent=0
    _
  %s6 = ssub.s32 1, %s4
  %s7 = scalar_select 0, %s6, %s4
  $region1: #{dice_ce_loss_multiclass.1} parent=0
    #allocation3 [shape = 'u8[512]{0}', space=smem, size = 0x200, scoped, tag = 'output window, operand 0, single buffered']
    #allocation4 [shape = 's32[1]{0}', space=sflag, size = 0x4, scoped, tag = 'scoped memory for dice_ce_loss_multiclass.1']
    %8 = vsyncpa [#allocation4], 0
    // Predicated region
    $region2: #{dice_ce_loss_multiclass.1} parent=1 // pred_check
      _
    $region3: #{dice_ce_loss_multiclass.1} parent=1 // pred_check_branch
      %10 = sbr.rel (0) target = $region5
    $region4: #{dice_ce_loss_multiclass.1} parent=1 // pred_region
      %s11 = sadd.s32 0, 0
      %p12 = scmp.lt.s32.totalorder %s11, 0
      %s13 = scalar_select %p12, %s11, 0
      %s14 = smul.u32 3, %s13
      %p15 = scmp.lt.s32.totalorder %s14, 2
      %s16 = scalar_select %p15, %s14, 2
      %s17 = smul.addr %s16, 2
      %s18 = smul.addr %s17, 8
      %s19 = scalar_lea.vmem %s0, %s18
      %s20 = sadd.s32 0, 0
      %p21 = scmp.lt.s32.totalorder %s20, 0
      %s22 = scalar_select %p21, %s20, 0
      %s23 = smul.u32 3, %s22
    $region5: #{dice_ce_loss_multiclass.1} parent=1 // pred_fallthru
      _
    // Predicated region
    $region6: #{dice_ce_loss_multiclass.1} parent=1 // pred_check
      _
    $region7: #{dice_ce_loss_multiclass.1} parent=1 // pred_check_branch
      %25 = sbr.rel (0) target = $region9
    $region8: #{dice_ce_loss_multiclass.1} parent=1 // pred_region
      %s26 = sadd.s32 0, 0
      %p27 = scmp.lt.s32.totalorder %s26, 0
      %s28 = scalar_select %p27, %s26, 0
      %s29 = smul.u32 3, %s28
      %p30 = scmp.lt.s32.totalorder %s29, 2
      %s31 = scalar_select %p30, %s29, 2
      %s32 = smul.addr %s31, 2
      %s33 = smul.addr %s32, 8
      %s34 = scalar_lea.vmem %s1, %s33
      %s35 = sadd.s32 0, 0
      %p36 = scmp.lt.s32.totalorder %s35, 0
      %s37 = scalar_select %p36, %s35, 0
      %s38 = smul.u32 3, %s37
    $region9: #{dice_ce_loss_multiclass.1} parent=1 // pred_fallthru
      _
    // Predicated region
    $region10: #{dice_ce_loss_multiclass.1} parent=1 // pred_check
      _
    $region11: #{dice_ce_loss_multiclass.1} parent=1 // pred_check_branch
      %40 = sbr.rel (0) target = $region13
    $region12: #{dice_ce_loss_multiclass.1} parent=1 // pred_region
      %s41 = sadd.s32 0, 0
      %p42 = scmp.lt.s32.totalorder %s41, 0
      %s43 = scalar_select %p42, %s41, 0
      %s44 = smul.u32 3, %s43
      %p45 = scmp.lt.s32.totalorder %s44, 2
      %s46 = scalar_select %p45, %s44, 2
      %s47 = smul.addr %s46, 2
      %s48 = smul.addr %s47, 8
      %s49 = scalar_lea.vmem %s2, %s48
      %s50 = sadd.s32 0, 0
      %p51 = scmp.lt.s32.totalorder %s50, 0
      %s52 = scalar_select %p51, %s50, 0
      %s53 = smul.u32 3, %s52
    $region13: #{dice_ce_loss_multiclass.1} parent=1 // pred_fallthru
      _
    %s54 = sadd.s32 0, 0
    %p55 = scmp.lt.s32.totalorder %s54, 0
    %s56 = scalar_select %p55, %s54, 0
    %s57 = smul.u32 3, %s56
    %p58 = scmp.lt.s32.totalorder %s57, 2
    %s59 = scalar_select %p58, %s57, 2
    %s60 = smul.addr %s59, 2
    %s61 = smul.addr %s60, 8
    %s62 = scalar_lea.vmem %s0, %s61
    %s63 = sadd.s32 0, 0
    %p64 = scmp.lt.s32.totalorder %s63, 0
    %s65 = scalar_select %p64, %s63, 0
    %s66 = smul.u32 3, %s65
    %p67 = scmp.lt.s32.totalorder %s66, 2
    %s68 = scalar_select %p67, %s66, 2
    %s69 = smul.addr %s68, 2
    %s70 = smul.addr %s69, 8
    %s71 = scalar_lea.vmem %s1, %s70
    %s72 = sadd.s32 0, 0
    %p73 = scmp.lt.s32.totalorder %s72, 0
    %s74 = scalar_select %p73, %s72, 0
    %s75 = smul.u32 3, %s74
    %p76 = scmp.lt.s32.totalorder %s75, 2
    %s77 = scalar_select %p76, %s75, 2
    %s78 = smul.addr %s77, 2
    %s79 = smul.addr %s78, 8
    %s80 = scalar_lea.vmem %s2, %s79
    %s81 = sadd.s32 0, 0
    %p82 = scmp.lt.s32.totalorder %s81, 0
    %s83 = scalar_select %p82, %s81, 0
    %s84 = smul.u32 3, %s83
    %p85 = scmp.lt.s32.totalorder %s84, 2
    %s86 = scalar_select %p85, %s84, 2
    %s87 = smul.addr %s86, 2
    %s88 = smul.addr %s87, 8
    %s89 = scalar_lea.vmem %s0, %s88
    %s90 = sadd.s32 0, 0
    %p91 = scmp.lt.s32.totalorder %s90, 0
    %s92 = scalar_select %p91, %s90, 0
    %s93 = smul.u32 3, %s92
    %s94 = sadd.s32 0, 0
    %p95 = scmp.lt.s32.totalorder %s94, 0
    %s96 = scalar_select %p95, %s94, 0
    %s97 = smul.u32 3, %s96
    %p98 = scmp.lt.s32.totalorder %s97, 2
    %s99 = scalar_select %p98, %s97, 2
    %s100 = smul.addr %s99, 2
    %s101 = smul.addr %s100, 8
    %s102 = scalar_lea.vmem %s1, %s101
    %s103 = sadd.s32 0, 0
    %p104 = scmp.lt.s32.totalorder %s103, 0
    %s105 = scalar_select %p104, %s103, 0
    %s106 = smul.u32 3, %s105
    %s107 = sadd.s32 0, 0
    %p108 = scmp.lt.s32.totalorder %s107, 0
    %s109 = scalar_select %p108, %s107, 0
    %s110 = smul.u32 3, %s109
    %p111 = scmp.lt.s32.totalorder %s110, 2
    %s112 = scalar_select %p111, %s110, 2
    %s113 = smul.addr %s112, 2
    %s114 = smul.addr %s113, 8
    %s115 = scalar_lea.vmem %s2, %s114
    %s116 = sadd.s32 0, 0
    %p117 = scmp.lt.s32.totalorder %s116, 0
    %s118 = scalar_select %p117, %s116, 0
    %s119 = smul.u32 3, %s118
    %p120 = scmp.eq.s32.totalorder 0, 0
    // Predicated region
    $region14: #{dice_ce_loss_multiclass.1} parent=1 // pred_check
      %p121 = pneg %p120
    $region15: #{dice_ce_loss_multiclass.1} parent=1 // pred_check_branch
      %123 = sbr.rel (%p121) target = $region17
    $region16: #{dice_ce_loss_multiclass.1} parent=1 // pred_region
      %124 = vst [vmem:[#allocation2] sm:$0xff] 0.0
      %125 = vst [vmem:[#allocation2 + $0x8] sm:$0xff] 0.0
    $region17: #{dice_ce_loss_multiclass.1} parent=1 // pred_fallthru
      _
    %v126 = vld [vmem:[%s89] sm:$0xff]
    %v127 = vld [vmem:[%s89 + $0x8] sm:$0xff]
    %v128 = vld [vmem:[%s89 + $0x10] sm:$0xff]
    %v129 = vld [vmem:[%s89 + $0x18] sm:$0xff]
    %v130 = vld [vmem:[%s89 + $0x20] sm:$0xf]
    %v131 = vld [vmem:[%s89 + $0x28] sm:$0xf]
    %s132 = scalar_lea.vmem %s89, 48
    %v133 = vld [vmem:[%s132] sm:$0xff]
    %v134 = vld [vmem:[%s132 + $0x8] sm:$0xff]
    %v135 = vld [vmem:[%s132 + $0x10] sm:$0xff]
    %v136 = vld [vmem:[%s132 + $0x18] sm:$0xff]
    %v137 = vld [vmem:[%s132 + $0x20] sm:$0xf]
    %v138 = vld [vmem:[%s132 + $0x28] sm:$0xf]
    %v139 = vld [vmem:[%s102] sm:$0xff]
    %v140 = vld [vmem:[%s102 + $0x8] sm:$0xff]
    %v141 = vld [vmem:[%s102 + $0x10] sm:$0xff]
    %v142 = vld [vmem:[%s102 + $0x18] sm:$0xff]
    %v143 = vld [vmem:[%s102 + $0x20] sm:$0xf]
    %v144 = vld [vmem:[%s102 + $0x28] sm:$0xf]
    %v145 = vld [vmem:[%s115] sm:$0xff]
    %v146 = vld [vmem:[%s115 + $0x8] sm:$0xff]
    %v147 = vld [vmem:[%s115 + $0x10] sm:$0xff]
    %v148 = vld [vmem:[%s115 + $0x18] sm:$0xff]
    %v149 = vld [vmem:[%s115 + $0x20] sm:$0xf]
    %v150 = vld [vmem:[%s115 + $0x28] sm:$0xf]
    %v151 = vlog2.pop %v126
    %v152 = vmul.f32 %v151, 0.6931472
    %v153 = vlog2.pop %v127
    %v154 = vmul.f32 %v153, 0.6931472
    %v155 = vlog2.pop %v128
    %v156 = vmul.f32 %v155, 0.6931472
    %v157 = vlog2.pop %v129
    %v158 = vmul.f32 %v157, 0.6931472
    %v159 = vlog2.pop %v130
    %v160 = vmul.f32 %v159, 0.6931472
    %v161 = vlog2.pop %v131
    %v162 = vmul.f32 %v161, 0.6931472
    %v163 = vmax.f32 %v152, -100.0
    %v164 = vmax.f32 %v154, -100.0
    %v165 = vmax.f32 %v156, -100.0
    %v166 = vmax.f32 %v158, -100.0
    %v167 = vmax.f32 %v160, -100.0
    %v168 = vmax.f32 %v162, -100.0
    %v169 = vsub.f32 1.0, %v126
    %v170 = vsub.f32 1.0, %v127
    %v171 = vsub.f32 1.0, %v128
    %v172 = vsub.f32 1.0, %v129
    %v173 = vsub.f32 1.0, %v130
    %v174 = vsub.f32 1.0, %v131
    %v175 = vlog2.pop %v169
    %v176 = vmul.f32 %v175, 0.6931472
    %v177 = vlog2.pop %v170
    %v178 = vmul.f32 %v177, 0.6931472
    %v179 = vlog2.pop %v171
    %v180 = vmul.f32 %v179, 0.6931472
    %v181 = vlog2.pop %v172
    %v182 = vmul.f32 %v181, 0.6931472
    %v183 = vlog2.pop %v173
    %v184 = vmul.f32 %v183, 0.6931472
    %v185 = vlog2.pop %v174
    %v186 = vmul.f32 %v185, 0.6931472
    %v187 = vmax.f32 %v176, -100.0
    %v188 = vmax.f32 %v178, -100.0
    %v189 = vmax.f32 %v180, -100.0
    %v190 = vmax.f32 %v182, -100.0
    %v191 = vmax.f32 %v184, -100.0
    %v192 = vmax.f32 %v186, -100.0
    %v193 = vsub.f32 %v163, %v187
    %v194 = vsub.f32 %v164, %v188
    %v195 = vsub.f32 %v165, %v189
    %v196 = vsub.f32 %v166, %v190
    %v197 = vsub.f32 %v167, %v191
    %v198 = vsub.f32 %v168, %v192
    %v199 = vmul.f32 %v139, %v193
    %v200 = vmul.f32 %v140, %v194
    %v201 = vmul.f32 %v141, %v195
    %v202 = vmul.f32 %v142, %v196
    %v203 = vmul.f32 %v143, %v197
    %v204 = vmul.f32 %v144, %v198
    %v205 = vadd.f32 %v187, %v199
    %v206 = vadd.f32 %v188, %v200
    %v207 = vadd.f32 %v189, %v201
    %v208 = vadd.f32 %v190, %v202
    %v209 = vadd.f32 %v191, %v203
    %v210 = vadd.f32 %v192, %v204
    %v211 = vlog2.pop %v133
    %v212 = vmul.f32 %v211, 0.6931472
    %v213 = vlog2.pop %v134
    %v214 = vmul.f32 %v213, 0.6931472
    %v215 = vlog2.pop %v135
    %v216 = vmul.f32 %v215, 0.6931472
    %v217 = vlog2.pop %v136
    %v218 = vmul.f32 %v217, 0.6931472
    %v219 = vlog2.pop %v137
    %v220 = vmul.f32 %v219, 0.6931472
    %v221 = vlog2.pop %v138
    %v222 = vmul.f32 %v221, 0.6931472
    %v223 = vmax.f32 %v212, -100.0
    %v224 = vmax.f32 %v214, -100.0
    %v225 = vmax.f32 %v216, -100.0
    %v226 = vmax.f32 %v218, -100.0
    %v227 = vmax.f32 %v220, -100.0
    %v228 = vmax.f32 %v222, -100.0
    %v229 = vsub.f32 1.0, %v133
    %v230 = vsub.f32 1.0, %v134
    %v231 = vsub.f32 1.0, %v135
    %v232 = vsub.f32 1.0, %v136
    %v233 = vsub.f32 1.0, %v137
    %v234 = vsub.f32 1.0, %v138
    %v235 = vlog2.pop %v229
    %v236 = vmul.f32 %v235, 0.6931472
    %v237 = vlog2.pop %v230
    %v238 = vmul.f32 %v237, 0.6931472
    %v239 = vlog2.pop %v231
    %v240 = vmul.f32 %v239, 0.6931472
    %v241 = vlog2.pop %v232
    %v242 = vmul.f32 %v241, 0.6931472
    %v243 = vlog2.pop %v233
    %v244 = vmul.f32 %v243, 0.6931472
    %v245 = vlog2.pop %v234
    %v246 = vmul.f32 %v245, 0.6931472
    %v247 = vmax.f32 %v236, -100.0
    %v248 = vmax.f32 %v238, -100.0
    %v249 = vmax.f32 %v240, -100.0
    %v250 = vmax.f32 %v242, -100.0
    %v251 = vmax.f32 %v244, -100.0
    %v252 = vmax.f32 %v246, -100.0
    %v253 = vsub.f32 %v223, %v247
    %v254 = vsub.f32 %v224, %v248
    %v255 = vsub.f32 %v225, %v249
    %v256 = vsub.f32 %v226, %v250
    %v257 = vsub.f32 %v227, %v251
    %v258 = vsub.f32 %v228, %v252
    %v259 = vmul.f32 %v145, %v253
    %v260 = vmul.f32 %v146, %v254
    %v261 = vmul.f32 %v147, %v255
    %v262 = vmul.f32 %v148, %v256
    %v263 = vmul.f32 %v149, %v257
    %v264 = vmul.f32 %v150, %v258
    %v265 = vadd.f32 %v247, %v259
    %v266 = vadd.f32 %v248, %v260
    %v267 = vadd.f32 %v249, %v261
    %v268 = vadd.f32 %v250, %v262
    %v269 = vadd.f32 %v251, %v263
    %v270 = vadd.f32 %v252, %v264
    %v271 = vld [vmem:[#allocation2] ss:$8 sm:$0x3]
    %v272 = vadd.f32 %v205, %v207
    %vm273 = vcmask 1043456
    %v274 = vsel %vm273, %v209, 0.0
    %v275 = vadd.f32 %v272, %v274
    %v276 = vrot.slane %v275, 4
    %v277 = vadd.f32 %v275, %v276
    %v278 = vrot.slane %v277, 2
    %v279 = vadd.f32 %v277, %v278
    %v280 = vrot.slane %v279, 1
    %v281 = vadd.f32 %v279, %v280
    %v282 = vadd.f32 %v206, %v208
    %v283 = vsel %vm273, %v210, 0.0
    %v284 = vadd.f32 %v282, %v283
    %v285 = vrot.slane %v284, 4
    %v286 = vadd.f32 %v284, %v285
    %v287 = vrot.slane %v286, 2
    %v288 = vadd.f32 %v286, %v287
    %v289 = vrot.slane %v288, 1
    %v290 = vadd.f32 %v288, %v289
    %v293 = vcombine.low %v281, %v290
    %v295 = vunpack.c.l.s4 1966171168
    %v296 = vunpack.c.0.s8 %v295
    %v297 = vlaneseq
    %v298 = vshrl.u32 %v297, 7
    %v299 = vsub.s32 %v296, %v298
    %v300 = vrot.slane %v293, %v299
    %v302 = vunpack.c.l.s4 1966171168
    %v303 = vunpack.c.0.s8 %v302
    %v304 = vlaneseq
    %v305 = vshrl.u32 %v304, 7
    %v306 = vsub.s32 %v303, %v305
    %v307 = vrot.slane %v300, %v306
    %v309 = vadd.f32 %v271, %v307
    %v310 = vlaneseq
    %vm311 = vcmp.ge.s32.totalorder %v310, 0
    %vm312 = vcmp.lt.s32.totalorder %v310, 256
    %vm313 = vmand %vm311, %vm312
    %314 = vst.msk [vmem:[#allocation2] ss:$8 sm:$0x3] %vm313, %v309
    %315 = vst.msk [vmem:[#allocation2] ss:$8 sm:$0x0] %vm313, %v309
    %s316 = scalar_lea.vmem [#allocation2], 1
    %v317 = vld [vmem:[%s316] ss:$8 sm:$0x3]
    %v318 = vadd.f32 %v265, %v267
    %v319 = vsel %vm273, %v269, 0.0
    %v320 = vadd.f32 %v318, %v319
    %v321 = vrot.slane %v320, 4
    %v322 = vadd.f32 %v320, %v321
    %v323 = vrot.slane %v322, 2
    %v324 = vadd.f32 %v322, %v323
    %v325 = vrot.slane %v324, 1
    %v326 = vadd.f32 %v324, %v325
    %v327 = vadd.f32 %v266, %v268
    %v328 = vsel %vm273, %v270, 0.0
    %v329 = vadd.f32 %v327, %v328
    %v330 = vrot.slane %v329, 4
    %v331 = vadd.f32 %v329, %v330
    %v332 = vrot.slane %v331, 2
    %v333 = vadd.f32 %v331, %v332
    %v334 = vrot.slane %v333, 1
    %v335 = vadd.f32 %v333, %v334
    %v338 = vcombine.low %v326, %v335
    %v340 = vunpack.c.l.s4 1966171168
    %v341 = vunpack.c.0.s8 %v340
    %v342 = vlaneseq
    %v343 = vshrl.u32 %v342, 7
    %v344 = vsub.s32 %v341, %v343
    %v345 = vrot.slane %v338, %v344
    %v347 = vunpack.c.l.s4 1966171168
    %v348 = vunpack.c.0.s8 %v347
    %v349 = vlaneseq
    %v350 = vshrl.u32 %v349, 7
    %v351 = vsub.s32 %v348, %v350
    %v352 = vrot.slane %v345, %v351
    %v354 = vadd.f32 %v317, %v352
    %355 = vst.msk [vmem:[%s316] ss:$8 sm:$0x3] %vm313, %v354
    %356 = vst.msk [vmem:[%s316] ss:$8 sm:$0x0] %vm313, %v354
    %s357 = scalar_lea.vmem [#allocation2], 2
    %v358 = vld [vmem:[%s357] ss:$8 sm:$0x3]
    %v359 = vmul.f32 %v126, %v139
    %v360 = vmul.f32 %v127, %v140
    %v361 = vmul.f32 %v128, %v141
    %v362 = vmul.f32 %v129, %v142
    %v363 = vmul.f32 %v130, %v143
    %v364 = vmul.f32 %v131, %v144
    %v365 = vadd.f32 %v359, %v361
    %v366 = vsel %vm273, %v363, 0.0
    %v367 = vadd.f32 %v365, %v366
    %v368 = vrot.slane %v367, 4
    %v369 = vadd.f32 %v367, %v368
    %v370 = vrot.slane %v369, 2
    %v371 = vadd.f32 %v369, %v370
    %v372 = vrot.slane %v371, 1
    %v373 = vadd.f32 %v371, %v372
    %v374 = vadd.f32 %v360, %v362
    %v375 = vsel %vm273, %v364, 0.0
    %v376 = vadd.f32 %v374, %v375
    %v377 = vrot.slane %v376, 4
    %v378 = vadd.f32 %v376, %v377
    %v379 = vrot.slane %v378, 2
    %v380 = vadd.f32 %v378, %v379
    %v381 = vrot.slane %v380, 1
    %v382 = vadd.f32 %v380, %v381
    %v385 = vcombine.low %v373, %v382
    %v387 = vunpack.c.l.s4 1966171168
    %v388 = vunpack.c.0.s8 %v387
    %v389 = vlaneseq
    %v390 = vshrl.u32 %v389, 7
    %v391 = vsub.s32 %v388, %v390
    %v392 = vrot.slane %v385, %v391
    %v394 = vunpack.c.l.s4 1966171168
    %v395 = vunpack.c.0.s8 %v394
    %v396 = vlaneseq
    %v397 = vshrl.u32 %v396, 7
    %v398 = vsub.s32 %v395, %v397
    %v399 = vrot.slane %v392, %v398
    %v401 = vadd.f32 %v358, %v399
    %402 = vst.msk [vmem:[%s357] ss:$8 sm:$0x3] %vm313, %v401
    %403 = vst.msk [vmem:[%s357] ss:$8 sm:$0x0] %vm313, %v401
    %s404 = scalar_lea.vmem [#allocation2], 3
    %v405 = vld [vmem:[%s404] ss:$8 sm:$0x3]
    %v406 = vadd.f32 %v126, %v128
    %v407 = vsel %vm273, %v130, 0.0
    %v408 = vadd.f32 %v406, %v407
    %v409 = vrot.slane %v408, 4
    %v410 = vadd.f32 %v408, %v409
    %v411 = vrot.slane %v410, 2
    %v412 = vadd.f32 %v410, %v411
    %v413 = vrot.slane %v412, 1
    %v414 = vadd.f32 %v412, %v413
    %v415 = vadd.f32 %v127, %v129
    %v416 = vsel %vm273, %v131, 0.0
    %v417 = vadd.f32 %v415, %v416
    %v418 = vrot.slane %v417, 4
    %v419 = vadd.f32 %v417, %v418
    %v420 = vrot.slane %v419, 2
    %v421 = vadd.f32 %v419, %v420
    %v422 = vrot.slane %v421, 1
    %v423 = vadd.f32 %v421, %v422
    %v426 = vcombine.low %v414, %v423
    %v428 = vunpack.c.l.s4 1966171168
    %v429 = vunpack.c.0.s8 %v428
    %v430 = vlaneseq
    %v431 = vshrl.u32 %v430, 7
    %v432 = vsub.s32 %v429, %v431
    %v433 = vrot.slane %v426, %v432
    %v435 = vunpack.c.l.s4 1966171168
    %v436 = vunpack.c.0.s8 %v435
    %v437 = vlaneseq
    %v438 = vshrl.u32 %v437, 7
    %v439 = vsub.s32 %v436, %v438
    %v440 = vrot.slane %v433, %v439
    %v442 = vadd.f32 %v405, %v440
    %443 = vst.msk [vmem:[%s404] ss:$8 sm:$0x3] %vm313, %v442
    %444 = vst.msk [vmem:[%s404] ss:$8 sm:$0x0] %vm313, %v442
    %s445 = scalar_lea.vmem [#allocation2], 4
    %v446 = vld [vmem:[%s445] ss:$8 sm:$0x3]
    %v447 = vadd.f32 %v139, %v141
    %v448 = vsel %vm273, %v143, 0.0
    %v449 = vadd.f32 %v447, %v448
    %v450 = vrot.slane %v449, 4
    %v451 = vadd.f32 %v449, %v450
    %v452 = vrot.slane %v451, 2
    %v453 = vadd.f32 %v451, %v452
    %v454 = vrot.slane %v453, 1
    %v455 = vadd.f32 %v453, %v454
    %v456 = vadd.f32 %v140, %v142
    %v457 = vsel %vm273, %v144, 0.0
    %v458 = vadd.f32 %v456, %v457
    %v459 = vrot.slane %v458, 4
    %v460 = vadd.f32 %v458, %v459
    %v461 = vrot.slane %v460, 2
    %v462 = vadd.f32 %v460, %v461
    %v463 = vrot.slane %v462, 1
    %v464 = vadd.f32 %v462, %v463
    %v467 = vcombine.low %v455, %v464
    %v469 = vunpack.c.l.s4 1966171168
    %v470 = vunpack.c.0.s8 %v469
    %v471 = vlaneseq
    %v472 = vshrl.u32 %v471, 7
    %v473 = vsub.s32 %v470, %v472
    %v474 = vrot.slane %v467, %v473
    %v476 = vunpack.c.l.s4 1966171168
    %v477 = vunpack.c.0.s8 %v476
    %v478 = vlaneseq
    %v479 = vshrl.u32 %v478, 7
    %v480 = vsub.s32 %v477, %v479
    %v481 = vrot.slane %v474, %v480
    %v483 = vadd.f32 %v446, %v481
    %484 = vst.msk [vmem:[%s445] ss:$8 sm:$0x3] %vm313, %v483
    %485 = vst.msk [vmem:[%s445] ss:$8 sm:$0x0] %vm313, %v483
    %s486 = scalar_lea.vmem [#allocation2], 5
    %v487 = vld [vmem:[%s486] ss:$8 sm:$0x3]
    %v488 = vmul.f32 %v133, %v145
    %v489 = vmul.f32 %v134, %v146
    %v490 = vmul.f32 %v135, %v147
    %v491 = vmul.f32 %v136, %v148
    %v492 = vmul.f32 %v137, %v149
    %v493 = vmul.f32 %v138, %v150
    %v494 = vadd.f32 %v488, %v490
    %v495 = vsel %vm273, %v492, 0.0
    %v496 = vadd.f32 %v494, %v495
    %v497 = vrot.slane %v496, 4
    %v498 = vadd.f32 %v496, %v497
    %v499 = vrot.slane %v498, 2
    %v500 = vadd.f32 %v498, %v499
    %v501 = vrot.slane %v500, 1
    %v502 = vadd.f32 %v500, %v501
    %v503 = vadd.f32 %v489, %v491
    %v504 = vsel %vm273, %v493, 0.0
    %v505 = vadd.f32 %v503, %v504
    %v506 = vrot.slane %v505, 4
    %v507 = vadd.f32 %v505, %v506
    %v508 = vrot.slane %v507, 2
    %v509 = vadd.f32 %v507, %v508
    %v510 = vrot.slane %v509, 1
    %v511 = vadd.f32 %v509, %v510
    %v514 = vcombine.low %v502, %v511
    %v516 = vunpack.c.l.s4 1966171168
    %v517 = vunpack.c.0.s8 %v516
    %v518 = vlaneseq
    %v519 = vshrl.u32 %v518, 7
    %v520 = vsub.s32 %v517, %v519
    %v521 = vrot.slane %v514, %v520
    %v523 = vunpack.c.l.s4 1966171168
    %v524 = vunpack.c.0.s8 %v523
    %v525 = vlaneseq
    %v526 = vshrl.u32 %v525, 7
    %v527 = vsub.s32 %v524, %v526
    %v528 = vrot.slane %v521, %v527
    %v530 = vadd.f32 %v487, %v528
    %531 = vst.msk [vmem:[%s486] ss:$8 sm:$0x3] %vm313, %v530
    %532 = vst.msk [vmem:[%s486] ss:$8 sm:$0x0] %vm313, %v530
    %s533 = scalar_lea.vmem [#allocation2], 6
    %v534 = vld [vmem:[%s533] ss:$8 sm:$0x3]
    %v535 = vadd.f32 %v133, %v135
    %v536 = vsel %vm273, %v137, 0.0
    %v537 = vadd.f32 %v535, %v536
    %v538 = vrot.slane %v537, 4
    %v539 = vadd.f32 %v537, %v538
    %v540 = vrot.slane %v539, 2
    %v541 = vadd.f32 %v539, %v540
    %v542 = vrot.slane %v541, 1
    %v543 = vadd.f32 %v541, %v542
    %v544 = vadd.f32 %v134, %v136
    %v545 = vsel %vm273, %v138, 0.0
    %v546 = vadd.f32 %v544, %v545
    %v547 = vrot.slane %v546, 4
    %v548 = vadd.f32 %v546, %v547
    %v549 = vrot.slane %v548, 2
    %v550 = vadd.f32 %v548, %v549
    %v551 = vrot.slane %v550, 1
    %v552 = vadd.f32 %v550, %v551
    %v555 = vcombine.low %v543, %v552
    %v557 = vunpack.c.l.s4 1966171168
    %v558 = vunpack.c.0.s8 %v557
    %v559 = vlaneseq
    %v560 = vshrl.u32 %v559, 7
    %v561 = vsub.s32 %v558, %v560
    %v562 = vrot.slane %v555, %v561
    %v564 = vunpack.c.l.s4 1966171168
    %v565 = vunpack.c.0.s8 %v564
    %v566 = vlaneseq
    %v567 = vshrl.u32 %v566, 7
    %v568 = vsub.s32 %v565, %v567
    %v569 = vrot.slane %v562, %v568
    %v571 = vadd.f32 %v534, %v569
    %572 = vst.msk [vmem:[%s533] ss:$8 sm:$0x3] %vm313, %v571
    %573 = vst.msk [vmem:[%s533] ss:$8 sm:$0x0] %vm313, %v571
    %s574 = scalar_lea.vmem [#allocation2], 7
    %v575 = vld [vmem:[%s574] ss:$8 sm:$0x3]
    %v576 = vadd.f32 %v145, %v147
    %v577 = vsel %vm273, %v149, 0.0
    %v578 = vadd.f32 %v576, %v577
    %v579 = vrot.slane %v578, 4
    %v580 = vadd.f32 %v578, %v579
    %v581 = vrot.slane %v580, 2
    %v582 = vadd.f32 %v580, %v581
    %v583 = vrot.slane %v582, 1
    %v584 = vadd.f32 %v582, %v583
    %v585 = vadd.f32 %v146, %v148
    %v586 = vsel %vm273, %v150, 0.0
    %v587 = vadd.f32 %v585, %v586
    %v588 = vrot.slane %v587, 4
    %v589 = vadd.f32 %v587, %v588
    %v590 = vrot.slane %v589, 2
    %v591 = vadd.f32 %v589, %v590
    %v592 = vrot.slane %v591, 1
    %v593 = vadd.f32 %v591, %v592
    %v596 = vcombine.low %v584, %v593
    %v598 = vunpack.c.l.s4 1966171168
    %v599 = vunpack.c.0.s8 %v598
    %v600 = vlaneseq
    %v601 = vshrl.u32 %v600, 7
    %v602 = vsub.s32 %v599, %v601
    %v603 = vrot.slane %v596, %v602
    %v605 = vunpack.c.l.s4 1966171168
    %v606 = vunpack.c.0.s8 %v605
    %v607 = vlaneseq
    %v608 = vshrl.u32 %v607, 7
    %v609 = vsub.s32 %v606, %v608
    %v610 = vrot.slane %v603, %v609
    %v612 = vadd.f32 %v575, %v610
    %613 = vst.msk [vmem:[%s574] ss:$8 sm:$0x3] %vm313, %v612
    %614 = vst.msk [vmem:[%s574] ss:$8 sm:$0x0] %vm313, %v612
    // Predicated region
    $region18: #{dice_ce_loss_multiclass.1} parent=1 // pred_check
      %p615 = pneg %p120
    $region19: #{dice_ce_loss_multiclass.1} parent=1 // pred_check_branch
      %617 = sbr.rel (%p615) target = $region21
    $region20: #{dice_ce_loss_multiclass.1} parent=1 // pred_region
      %v618 = vld [vmem:[#allocation2] ss:$8 sm:$0x3]
      %v620 = vlaneseq
      %v621 = vshrl.u32 %v620, 7
      %v622 = vsub.s32 0, %v621
      %v623 = vrot.slane %v618, %v622
      %v624 = vlaneseq
      %v625 = vshrl.u32 %v624, 7
      %v626 = vsub.s32 1, %v625
      %v627 = vrot.slane %v618, %v626
      %vm630 = vcmask 1040384
      %v631 = vsel %vm630, %v623, 0.0
      %v632 = vsel %vm630, %v627, 0.0
      %v633 = vadd.f32 %v631, %v632
      %634 = vadd.xlane.f32.xlu0 %v633
      %v635 = vpop.xlane.xlu0 %634
      %v636 = vrot.slane %v635, 4
      %v637 = vadd.f32 %v635, %v636
      %v638 = vrot.slane %v637, 2
      %v639 = vadd.f32 %v637, %v638
      %v640 = vrot.slane %v639, 1
      %v641 = vadd.f32 %v639, %v640
      %s642 = vtos %v641
      %s643 = scalar_lea.smem [#allocation3], 0
      %644 = sst [smem:[%s643]] %s642
      %v645 = vld [vmem:[%s316] ss:$8 sm:$0x3]
      %v647 = vlaneseq
      %v648 = vshrl.u32 %v647, 7
      %v649 = vsub.s32 0, %v648
      %v650 = vrot.slane %v645, %v649
      %v651 = vlaneseq
      %v652 = vshrl.u32 %v651, 7
      %v653 = vsub.s32 1, %v652
      %v654 = vrot.slane %v645, %v653
      %v657 = vsel %vm630, %v650, 0.0
      %v658 = vsel %vm630, %v654, 0.0
      %v659 = vadd.f32 %v657, %v658
      %660 = vadd.xlane.f32.xlu0 %v659
      %v661 = vpop.xlane.xlu0 %660
      %v662 = vrot.slane %v661, 4
      %v663 = vadd.f32 %v661, %v662
      %v664 = vrot.slane %v663, 2
      %v665 = vadd.f32 %v663, %v664
      %v666 = vrot.slane %v665, 1
      %v667 = vadd.f32 %v665, %v666
      %s668 = vtos %v667
      %s669 = scalar_lea.smem [#allocation3], 1
      %670 = sst [smem:[%s669]] %s668
      %v671 = vld [vmem:[%s357] ss:$8 sm:$0x3]
      %v673 = vlaneseq
      %v674 = vshrl.u32 %v673, 7
      %v675 = vsub.s32 0, %v674
      %v676 = vrot.slane %v671, %v675
      %v677 = vlaneseq
      %v678 = vshrl.u32 %v677, 7
      %v679 = vsub.s32 1, %v678
      %v680 = vrot.slane %v671, %v679
      %v683 = vsel %vm630, %v676, 0.0
      %v684 = vsel %vm630, %v680, 0.0
      %v685 = vadd.f32 %v683, %v684
      %686 = vadd.xlane.f32.xlu0 %v685
      %v687 = vpop.xlane.xlu0 %686
      %v688 = vrot.slane %v687, 4
      %v689 = vadd.f32 %v687, %v688
      %v690 = vrot.slane %v689, 2
      %v691 = vadd.f32 %v689, %v690
      %v692 = vrot.slane %v691, 1
      %v693 = vadd.f32 %v691, %v692
      %s694 = vtos %v693
      %s695 = scalar_lea.smem [#allocation3], 2
      %696 = sst [smem:[%s695]] %s694
      %v697 = vld [vmem:[%s404] ss:$8 sm:$0x3]
      %v699 = vlaneseq
      %v700 = vshrl.u32 %v699, 7
      %v701 = vsub.s32 0, %v700
      %v702 = vrot.slane %v697, %v701
      %v703 = vlaneseq
      %v704 = vshrl.u32 %v703, 7
      %v705 = vsub.s32 1, %v704
      %v706 = vrot.slane %v697, %v705
      %v709 = vsel %vm630, %v702, 0.0
      %v710 = vsel %vm630, %v706, 0.0
      %v711 = vadd.f32 %v709, %v710
      %712 = vadd.xlane.f32.xlu0 %v711
      %v713 = vpop.xlane.xlu0 %712
      %v714 = vrot.slane %v713, 4
      %v715 = vadd.f32 %v713, %v714
      %v716 = vrot.slane %v715, 2
      %v717 = vadd.f32 %v715, %v716
      %v718 = vrot.slane %v717, 1
      %v719 = vadd.f32 %v717, %v718
      %s720 = vtos %v719
      %s721 = scalar_lea.smem [#allocation3], 3
      %722 = sst [smem:[%s721]] %s720
      %v723 = vld [vmem:[%s445] ss:$8 sm:$0x3]
      %v725 = vlaneseq
      %v726 = vshrl.u32 %v725, 7
      %v727 = vsub.s32 0, %v726
      %v728 = vrot.slane %v723, %v727
      %v729 = vlaneseq
      %v730 = vshrl.u32 %v729, 7
      %v731 = vsub.s32 1, %v730
      %v732 = vrot.slane %v723, %v731
      %v735 = vsel %vm630, %v728, 0.0
      %v736 = vsel %vm630, %v732, 0.0
      %v737 = vadd.f32 %v735, %v736
      %738 = vadd.xlane.f32.xlu0 %v737
      %v739 = vpop.xlane.xlu0 %738
      %v740 = vrot.slane %v739, 4
      %v741 = vadd.f32 %v739, %v740
      %v742 = vrot.slane %v741, 2
      %v743 = vadd.f32 %v741, %v742
      %v744 = vrot.slane %v743, 1
      %v745 = vadd.f32 %v743, %v744
      %s746 = vtos %v745
      %s747 = scalar_lea.smem [#allocation3], 4
      %748 = sst [smem:[%s747]] %s746
      %v749 = vld [vmem:[%s486] ss:$8 sm:$0x3]
      %v751 = vlaneseq
      %v752 = vshrl.u32 %v751, 7
      %v753 = vsub.s32 0, %v752
      %v754 = vrot.slane %v749, %v753
      %v755 = vlaneseq
      %v756 = vshrl.u32 %v755, 7
      %v757 = vsub.s32 1, %v756
      %v758 = vrot.slane %v749, %v757
      %v761 = vsel %vm630, %v754, 0.0
      %v762 = vsel %vm630, %v758, 0.0
      %v763 = vadd.f32 %v761, %v762
      %764 = vadd.xlane.f32.xlu0 %v763
      %v765 = vpop.xlane.xlu0 %764
      %v766 = vrot.slane %v765, 4
      %v767 = vadd.f32 %v765, %v766
      %v768 = vrot.slane %v767, 2
      %v769 = vadd.f32 %v767, %v768
      %v770 = vrot.slane %v769, 1
      %v771 = vadd.f32 %v769, %v770
      %s772 = vtos %v771
      %s773 = scalar_lea.smem [#allocation3], 5
      %774 = sst [smem:[%s773]] %s772
      %v775 = vld [vmem:[%s533] ss:$8 sm:$0x3]
      %v777 = vlaneseq
      %v778 = vshrl.u32 %v777, 7
      %v779 = vsub.s32 0, %v778
      %v780 = vrot.slane %v775, %v779
      %v781 = vlaneseq
      %v782 = vshrl.u32 %v781, 7
      %v783 = vsub.s32 1, %v782
      %v784 = vrot.slane %v775, %v783
      %v787 = vsel %vm630, %v780, 0.0
      %v788 = vsel %vm630, %v784, 0.0
      %v789 = vadd.f32 %v787, %v788
      %790 = vadd.xlane.f32.xlu0 %v789
      %v791 = vpop.xlane.xlu0 %790
      %v792 = vrot.slane %v791, 4
      %v793 = vadd.f32 %v791, %v792
      %v794 = vrot.slane %v793, 2
      %v795 = vadd.f32 %v793, %v794
      %v796 = vrot.slane %v795, 1
      %v797 = vadd.f32 %v795, %v796
      %s798 = vtos %v797
      %s799 = scalar_lea.smem [#allocation3], 6
      %800 = sst [smem:[%s799]] %s798
      %v801 = vld [vmem:[%s574] ss:$8 sm:$0x3]
      %v803 = vlaneseq
      %v804 = vshrl.u32 %v803, 7
      %v805 = vsub.s32 0, %v804
      %v806 = vrot.slane %v801, %v805
      %v807 = vlaneseq
      %v808 = vshrl.u32 %v807, 7
      %v809 = vsub.s32 1, %v808
      %v810 = vrot.slane %v801, %v809
      %v813 = vsel %vm630, %v806, 0.0
      %v814 = vsel %vm630, %v810, 0.0
      %v815 = vadd.f32 %v813, %v814
      %816 = vadd.xlane.f32.xlu0 %v815
      %v817 = vpop.xlane.xlu0 %816
      %v818 = vrot.slane %v817, 4
      %v819 = vadd.f32 %v817, %v818
      %v820 = vrot.slane %v819, 2
      %v821 = vadd.f32 %v819, %v820
      %v822 = vrot.slane %v821, 1
      %v823 = vadd.f32 %v821, %v822
      %s824 = vtos %v823
      %s825 = scalar_lea.smem [#allocation3], 7
      %826 = sst [smem:[%s825]] %s824
    $region21: #{dice_ce_loss_multiclass.1} parent=1 // pred_fallthru
      _
    // Predicated region
    $region22: #{dice_ce_loss_multiclass.1} parent=1 // pred_check
      _
    $region23: #{dice_ce_loss_multiclass.1} parent=1 // pred_check_branch
      %828 = sbr.rel (0) target = $region25
    $region24: #{dice_ce_loss_multiclass.1} parent=1 // pred_region
      %s830 = ssub.s32 16, 16
      %831 = vsyncadd [#allocation4], %s830
      %s833 = sshll.u32 %s3, 4
      %s834 = int_to_ptr.vmem [resolvable:$true] %s833
      %836 = dma.smem_to_vmem [#allocation3], 16, %s834, [#allocation4]
    $region25: #{dice_ce_loss_multiclass.1} parent=1 // pred_fallthru
      _
    // Predicated region
    $region26: #{dice_ce_loss_multiclass.1} parent=1 // pred_check
      _
    $region27: #{dice_ce_loss_multiclass.1} parent=1 // pred_check_branch
      %838 = sbr.rel (0) target = $region29
    $region28: #{dice_ce_loss_multiclass.1} parent=1 // pred_region
      %839 = dma.done [#allocation4], 16
    $region29: #{dice_ce_loss_multiclass.1} parent=1 // pred_fallthru
      _
    %840 = sfence
    %841 = vsyncpa [#allocation4], 1

</llo_original>
